<compile_context>
chip_gen: v6e
topology: v6e:2x2x1
jax: 0.10.0
libtpu: 0.0.40
codegen_flags: <defaults>
</compile_context>

<pallas_src>
import jax
import jax.numpy as jnp
from jax import lax
from jax.experimental import pallas as pl
from jax.experimental.pallas import tpu as pltpu


LAYERNORM_EPS = 1e-12
_MIB = 1 << 20


def _bert_output_kernel(h_ref, w_ref, bias_ref, res_ref, gamma_ref, beta_ref,
                        o_ref):
    # h_ref:     (TM, I)   hidden_states row tile (full intermediate dim)
    # w_ref:     (I, H)    resident weight block (torch W.T), bf16
    # bias_ref:  (1, H)    f32
    # res_ref:   (TM, H)   residual (input_tensor) tile
    # gamma_ref: (1, H)    f32
    # beta_ref:  (1, H)    f32
    # o_ref:     (TM, H)
    h = h_ref[...]
    w = w_ref[...]
    if h.dtype != w.dtype:
        h = h.astype(w.dtype)          # bf16 operands -> single MXU pass
    y = jnp.dot(h, w, preferred_element_type=jnp.float32)   # f32 accumulate
    y = y + bias_ref[...]                                    # (1, H) broadcasts
    y = y + res_ref[...].astype(jnp.float32)                 # residual add
    # TF-style LayerNorm over the hidden (lane) axis, eps inside the sqrt.
    u = jnp.mean(y, axis=-1, keepdims=True)
    d = y - u
    s = jnp.mean(d * d, axis=-1, keepdims=True)
    normed = d * lax.rsqrt(s + LAYERNORM_EPS)                # rsqrt -> EUP slot
    out = gamma_ref[...] * normed + beta_ref[...]
    o_ref[...] = out.astype(o_ref.dtype)


def _footprint_bytes(tm, I, H, h_bytes, res_bytes, out_bytes, w_bytes):
    """Conservative double-buffered VMEM estimate for one grid step."""
    return (2 * tm * I * h_bytes          # hidden tile
            + 2 * tm * H * res_bytes      # residual tile
            + 2 * tm * H * out_bytes      # output tile
            + 2 * I * H * w_bytes         # resident weight (counted x2 to be safe)
            + 6 * H * 4)                  # bias / gamma / beta


def _pick_row_tile(Mp, I, H, h_bytes, res_bytes, out_bytes, w_bytes,
                   budget_bytes=28 * _MIB):
    """Largest row tile (multiple of 8, divides Mp) that fits the VMEM budget.

    Prefers >= 2 row tiles so the parallel row axis can be split across
    TensorCores (v7x megacore)."""
    candidates = (1024, 512, 256, 128, 64, 32, 16, 8)
    for require_two in (True, False):
        for tm in candidates:
            if tm > Mp or Mp % tm != 0:
                continue
            if require_two and Mp // tm < 2:
                continue
            if _footprint_bytes(tm, I, H, h_bytes, res_bytes, out_bytes,
                                w_bytes) <= budget_bytes:
                return tm
    return 8  # Mp is always a multiple of 8 after padding


def bert_output(hidden_states, input_tensor, weight, bias, gamma, beta,
                *, matmul_dtype=jnp.bfloat16):
    """Fused BERTOutput forward (eval mode).

    hidden_states: (B, S, I)   output of the intermediate layer
    input_tensor:  (B, S, H)   residual input
    weight:        (I, H)      dense weight, already transposed from torch's (H, I)
    bias:          (H,)
    gamma, beta:   (H,)        LayerNorm parameters
    matmul_dtype:  dtype used for the MXU matmul operands (bf16 recommended)
    returns:       (B, S, H)
    """
    B, S, I = hidden_states.shape
    Br, Sr, H = input_tensor.shape
    assert (B, S) == (Br, Sr)
    assert weight.shape == (I, H)

    M = B * S
    h2d = hidden_states.reshape(M, I)
    res2d = input_tensor.reshape(M, H)

    # Pad rows to a multiple of 8 sublanes so tiling never degenerates to one
    # huge full-extent block for odd M.
    Mp = ((M + 7) // 8) * 8
    if Mp != M:
        h2d = jnp.pad(h2d, ((0, Mp - M), (0, 0)))
        res2d = jnp.pad(res2d, ((0, Mp - M), (0, 0)))

    # Weight is fetched once (resident block): casting it in the wrapper is a
    # one-time cost and halves its VMEM footprint. Small params stay f32.
    w = weight.astype(matmul_dtype)
    bias2d = bias.reshape(1, H).astype(jnp.float32)
    gamma2d = gamma.reshape(1, H).astype(jnp.float32)
    beta2d = beta.reshape(1, H).astype(jnp.float32)

    out_dtype = input_tensor.dtype
    TM = _pick_row_tile(Mp, I, H,
                        h2d.dtype.itemsize, res2d.dtype.itemsize,
                        jnp.dtype(out_dtype).itemsize, w.dtype.itemsize)
    grid = (Mp // TM,)

    est = _footprint_bytes(TM, I, H, h2d.dtype.itemsize, res2d.dtype.itemsize,
                           jnp.dtype(out_dtype).itemsize, w.dtype.itemsize)
    vmem_limit = int(min(64 * _MIB, max(32 * _MIB, est + 8 * _MIB)))

    out2d = pl.pallas_call(
        _bert_output_kernel,
        out_shape=jax.ShapeDtypeStruct((Mp, H), out_dtype),
        grid_spec=pltpu.PrefetchScalarGridSpec(
            num_scalar_prefetch=0,
            grid=grid,
            in_specs=[
                pl.BlockSpec((TM, I), lambda i: (i, 0)),   # hidden_states tile
                pl.BlockSpec((I, H), lambda i: (0, 0)),    # weight (resident)
                pl.BlockSpec((1, H), lambda i: (0, 0)),    # bias   (resident)
                pl.BlockSpec((TM, H), lambda i: (i, 0)),   # residual tile
                pl.BlockSpec((1, H), lambda i: (0, 0)),    # gamma  (resident)
                pl.BlockSpec((1, H), lambda i: (0, 0)),    # beta   (resident)
            ],
            out_specs=pl.BlockSpec((TM, H), lambda i: (i, 0)),
        ),
        compiler_params=pltpu.CompilerParams(
            dimension_semantics=("parallel",),
            vmem_limit_bytes=vmem_limit,
        ),
    )(h2d, w, bias2d, res2d, gamma2d, beta2d)

    if Mp != M:
        out2d = out2d[:M]
    return out2d.reshape(B, S, H)


def bert_output_ref(hidden_states, input_tensor, weight, bias, gamma, beta,
                    matmul_dtype=jnp.float32):
    """Pure-JAX reference mirroring the PyTorch forward (eval mode)."""
    h = hidden_states.astype(matmul_dtype)
    w = weight.astype(matmul_dtype)
    y = jnp.einsum("bsi,ih->bsh", h, w,
                   preferred_element_type=jnp.float32) + bias
    y = y + input_tensor.astype(jnp.float32)
    u = jnp.mean(y, axis=-1, keepdims=True)
    s = jnp.mean((y - u) ** 2, axis=-1, keepdims=True)
    normed = (y - u) / jnp.sqrt(s + LAYERNORM_EPS)
    return gamma * normed + beta


if __name__ == "__main__":
    # Small shapes consistent with the module: batch=2, seq=8, hidden=32,
    # intermediate = 4 * hidden = 128.
    B, S, H = 2, 8, 32
    I = 4 * H

    key = jax.random.PRNGKey(0)
    kh, kr, kw, kb = jax.random.split(key, 4)

    hidden_states = jax.random.normal(kh, (B, S, I), dtype=jnp.float32)
    input_tensor = jax.random.normal(kr, (B, S, H), dtype=jnp.float32)
    # nn.Linear-style parameters (weight stored here as (I, H) = torch W.T).
    weight = jax.random.normal(kw, (I, H), dtype=jnp.float32) * (1.0 / (I ** 0.5))
    bias = jax.random.normal(kb, (H,), dtype=jnp.float32) * 0.01
    gamma = jnp.ones((H,), dtype=jnp.float32)   # BERTLayerNorm.gamma init
    beta = jnp.zeros((H,), dtype=jnp.float32)   # BERTLayerNorm.beta init

    out = bert_output(hidden_states, input_tensor, weight, bias, gamma, beta)
    out = jax.block_until_ready(out)
    assert out.shape == (B, S, H)

    # Tight check vs. a reference that uses the same bf16 matmul operands.
    ref_bf16 = bert_output_ref(hidden_states, input_tensor, weight, bias,
                               gamma, beta, matmul_dtype=jnp.bfloat16)
    assert jnp.allclose(out, ref_bf16, atol=1e-3, rtol=1e-3), \
        "mismatch vs bf16-matmul reference"

    # Loose sanity check vs. the pure-f32 reference (bf16-level tolerance).
    ref_f32 = bert_output_ref(hidden_states, input_tensor, weight, bias,
                              gamma, beta, matmul_dtype=jnp.float32)
    assert jnp.allclose(out, ref_f32, atol=5e-2, rtol=5e-2), \
        "mismatch vs f32 reference"

    print("KERNEL_OK")
</pallas_src>

<mosaic_0001>
module attributes {stable_mosaic.version = 11 : i64} {
  func.func @_bert_output_kernel(%arg0: i32, %arg1: memref<8x128xf32, #tpu.memory_space<vmem>>, %arg2: memref<128x32xbf16, #tpu.memory_space<vmem>>, %arg3: memref<1x32xf32, #tpu.memory_space<vmem>>, %arg4: memref<8x32xf32, #tpu.memory_space<vmem>>, %arg5: memref<1x32xf32, #tpu.memory_space<vmem>>, %arg6: memref<1x32xf32, #tpu.memory_space<vmem>>, %arg7: memref<8x32xf32, #tpu.memory_space<vmem>>) attributes {dimension_semantics = [#tpu.dimension_semantics<parallel>], iteration_bounds = array<i64: 2>, scalar_prefetch = 0 : i64, scratch_operands = 0 : i64, tpu.core_type = #tpu.core_type<tc>, window_params = [{transform_indices = @transform_0, window_bounds = array<i64: 8, 128>}, {pipeline_mode = #tpu.pipeline_mode<synchronous>, transform_indices = @transform_1, window_bounds = array<i64: 128, 32>}, {pipeline_mode = #tpu.pipeline_mode<synchronous>, transform_indices = @transform_2, window_bounds = array<i64: 1, 32>}, {transform_indices = @transform_3, window_bounds = array<i64: 8, 32>}, {pipeline_mode = #tpu.pipeline_mode<synchronous>, transform_indices = @transform_4, window_bounds = array<i64: 1, 32>}, {pipeline_mode = #tpu.pipeline_mode<synchronous>, transform_indices = @transform_5, window_bounds = array<i64: 1, 32>}, {transform_indices = @transform_6, window_bounds = array<i64: 8, 32>}]} {
    %c0 = arith.constant 0 : index
    %c0_0 = arith.constant 0 : index
    %0 = vector.load %arg1[%c0, %c0_0] : memref<8x128xf32, #tpu.memory_space<vmem>>, vector<8x128xf32>
    %c0_1 = arith.constant 0 : index
    %c0_2 = arith.constant 0 : index
    %1 = vector.load %arg2[%c0_1, %c0_2] : memref<128x32xbf16, #tpu.memory_space<vmem>>, vector<128x32xbf16>
    %2 = arith.truncf %0 : vector<8x128xf32> to vector<8x128xbf16>
    %cst = arith.constant dense<0.000000e+00> : vector<8x32xf32>
    %3 = tpu.matmul %2, %1, %cst {dimension_numbers = #tpu.dot_dimension_numbers<[1], [0], [0], [1], [0, 0, 1, 1], [], []>} : vector<8x128xbf16>, vector<128x32xbf16>, vector<8x32xf32> -> vector<8x32xf32>
    %c0_3 = arith.constant 0 : index
    %c0_4 = arith.constant 0 : index
    %4 = vector.load %arg3[%c0_3, %c0_4] : memref<1x32xf32, #tpu.memory_space<vmem>>, vector<1x32xf32>
    %5 = vector.broadcast %4 : vector<1x32xf32> to vector<8x32xf32>
    %6 = arith.addf %3, %5 : vector<8x32xf32>
    %c0_5 = arith.constant 0 : index
    %c0_6 = arith.constant 0 : index
    %7 = vector.load %arg4[%c0_5, %c0_6] : memref<8x32xf32, #tpu.memory_space<vmem>>, vector<8x32xf32>
    %8 = arith.addf %6, %7 : vector<8x32xf32>
    %cst_7 = arith.constant dense<0.000000e+00> : vector<8xf32>
    %9 = vector.multi_reduction <add>, %8, %cst_7 [1] : vector<8x32xf32> to vector<8xf32>
    %10 = vector.shape_cast %9 : vector<8xf32> to vector<8x1xf32>
    %cst_8 = arith.constant 3.200000e+01 : f32
    %11 = vector.broadcast %cst_8 : f32 to vector<8x1xf32>
    %12 = arith.divf %10, %11 : vector<8x1xf32>
    %13 = vector.broadcast %12 : vector<8x1xf32> to vector<8x32xf32>
    %14 = arith.subf %8, %13 : vector<8x32xf32>
    %15 = arith.mulf %14, %14 : vector<8x32xf32>
    %cst_9 = arith.constant dense<0.000000e+00> : vector<8xf32>
    %16 = vector.multi_reduction <add>, %15, %cst_9 [1] : vector<8x32xf32> to vector<8xf32>
    %17 = vector.shape_cast %16 : vector<8xf32> to vector<8x1xf32>
    %cst_10 = arith.constant 3.200000e+01 : f32
    %18 = vector.broadcast %cst_10 : f32 to vector<8x1xf32>
    %19 = arith.divf %17, %18 : vector<8x1xf32>
    %cst_11 = arith.constant 9.99999996E-13 : f32
    %20 = vector.broadcast %cst_11 : f32 to vector<8x1xf32>
    %21 = arith.addf %19, %20 : vector<8x1xf32>
    %22 = math.rsqrt %21 : vector<8x1xf32>
    %23 = vector.broadcast %22 : vector<8x1xf32> to vector<8x32xf32>
    %24 = arith.mulf %14, %23 : vector<8x32xf32>
    %c0_12 = arith.constant 0 : index
    %c0_13 = arith.constant 0 : index
    %25 = vector.load %arg5[%c0_12, %c0_13] : memref<1x32xf32, #tpu.memory_space<vmem>>, vector<1x32xf32>
    %26 = vector.broadcast %25 : vector<1x32xf32> to vector<8x32xf32>
    %27 = arith.mulf %26, %24 : vector<8x32xf32>
    %c0_14 = arith.constant 0 : index
    %c0_15 = arith.constant 0 : index
    %28 = vector.load %arg6[%c0_14, %c0_15] : memref<1x32xf32, #tpu.memory_space<vmem>>, vector<1x32xf32>
    %29 = vector.broadcast %28 : vector<1x32xf32> to vector<8x32xf32>
    %30 = arith.addf %27, %29 : vector<8x32xf32>
    %c0_16 = arith.constant 0 : index
    %c0_17 = arith.constant 0 : index
    %31 = vector.load %arg7[%c0_16, %c0_17] : memref<8x32xf32, #tpu.memory_space<vmem>>, vector<8x32xf32>
    tpu.vector_store %arg7[%c0_16, %c0_17], %30 {strides = array<i32>} : memref<8x32xf32, #tpu.memory_space<vmem>>, vector<8x32xf32>,
    return
  }
  func.func @transform_0(%arg0: i32) -> (i32, i32) {
    %c0_i32 = arith.constant 0 : i32
    %c0_i32_0 = arith.constant 0 : i32
    return %arg0, %c0_i32 : i32, i32
  }
  func.func @transform_1(%arg0: i32) -> (i32, i32) {
    %c0_i32 = arith.constant 0 : i32
    %c0_i32_0 = arith.constant 0 : i32
    %c0_i32_1 = arith.constant 0 : i32
    return %c0_i32, %c0_i32_0 : i32, i32
  }
  func.func @transform_2(%arg0: i32) -> (i32, i32) {
    %c0_i32 = arith.constant 0 : i32
    %c0_i32_0 = arith.constant 0 : i32
    %c0_i32_1 = arith.constant 0 : i32
    return %c0_i32, %c0_i32_0 : i32, i32
  }
  func.func @transform_3(%arg0: i32) -> (i32, i32) {
    %c0_i32 = arith.constant 0 : i32
    %c0_i32_0 = arith.constant 0 : i32
    return %arg0, %c0_i32 : i32, i32
  }
  func.func @transform_4(%arg0: i32) -> (i32, i32) {
    %c0_i32 = arith.constant 0 : i32
    %c0_i32_0 = arith.constant 0 : i32
    %c0_i32_1 = arith.constant 0 : i32
    return %c0_i32, %c0_i32_0 : i32, i32
  }
  func.func @transform_5(%arg0: i32) -> (i32, i32) {
    %c0_i32 = arith.constant 0 : i32
    %c0_i32_0 = arith.constant 0 : i32
    %c0_i32_1 = arith.constant 0 : i32
    return %c0_i32, %c0_i32_0 : i32, i32
  }
  func.func @transform_6(%arg0: i32) -> (i32, i32) {
    %c0_i32 = arith.constant 0 : i32
    %c0_i32_0 = arith.constant 0 : i32
    return %arg0, %c0_i32 : i32, i32
  }
}

</mosaic_0001>

<llo_original>
// kernel: tpu_custom_call.1
$region0: #{tpu_custom_call.1}
  #allocation0 [shape = 'u32[]', space=smem, size = 0x4, offset = 0x4, fixed_abs, tag = 'smem constant byte address 0x4 - core index']
  #allocation1 [shape = 'u32[144,128]{1,0:T(1,128)}', space=vmem, size = 0x12000, scoped, tag = 'internal scratch']
  %s0 = inlined_call_operand.vmem [shape: f32[16,128], index: 0, kind: input, shape index: {}]
  %s1 = inlined_call_operand.vmem [shape: bf16[128,32], index: 1, kind: input, shape index: {}]
  %s2 = inlined_call_operand.vmem [shape: f32[1,32], index: 2, kind: input, shape index: {}]
  %s3 = inlined_call_operand.vmem [shape: f32[16,32], index: 3, kind: input, shape index: {}]
  %s4 = inlined_call_operand.vmem [shape: f32[1,32], index: 4, kind: input, shape index: {}]
  %s5 = inlined_call_operand.vmem [shape: f32[1,32], index: 5, kind: input, shape index: {}]
  %s6 = inlined_call_operand.hbm [shape: f32[16,32], index: 6, kind: output, shape index: {}]
  %s7 = sld [smem:[#allocation0]]
  $region57: #{tpu_custom_call.1} parent=0
    _
  %s9 = ssub.s32 1, %s7
  %s10 = scalar_select 0, %s9, %s7
  $region1: #{tpu_custom_call.1} parent=0
    #allocation2 [shape = 'u8[8192]{0}', space=vmem, size = 0x2000, scoped, tag = 'output window, operand 0']
    #allocation3 [shape = 's32[2]{0}', space=sflag, size = 0x8, scoped, tag = 'scoped memory for tpu_custom_call.1']
    %11 = vsyncpa [#allocation3], 0
    %s12 = scalar_lea.sflag [#allocation3], 1
    %13 = vsyncpa %s12, 0
    loop: start=0, step=1, limit=4
    $region2: #{tpu_custom_call.1} parent=1 // loop_pre_header
      _
    $region3: #{tpu_custom_call.1} parent=1 // loop_header
      %s15 = sphi 0, %s19
      %p16 = scmp.ge.s32.totalorder %s15, 4
      %s25 = sphi 0, %s27
      %s28 = sphi 0, %s25
      %s29 = sphi 0, %s28
      %s45 = sphi 0, %s29
      %s49 = sphi 0, %s49
      %s51 = sphi 0, %s49
      %s52 = sphi 0, %s51
      %s66 = sphi 0, %s52
      %s70 = sphi 0, %s70
      %s72 = sphi 0, %s70
      %s73 = sphi 0, %s72
      %s87 = sphi 0, %s73
      %s93 = sphi 0, %s95
      %s96 = sphi 0, %s93
      %s97 = sphi 0, %s96
      %s113 = sphi 0, %s97
      %s117 = sphi 0, %s117
      %s119 = sphi 0, %s117
      %s120 = sphi 0, %s119
      %s134 = sphi 0, %s120
      %s138 = sphi 0, %s138
      %s140 = sphi 0, %s138
      %s141 = sphi 0, %s140
      %s155 = sphi 0, %s141
      %s161 = sphi 0, %s163
      %s164 = sphi 0, %s161
      %s165 = sphi 0, %s164
      %s181 = sphi 0, %s165
    $region4: #{tpu_custom_call.1} parent=1 // loop_header_branch
      %18 = sbr.rel (%p16) target = $region8
    $region5: #{tpu_custom_call.1} parent=1 // loop_body
      %s20 = ssub.s32 %s15, 1
      %s21 = ssub.s32 %s15, 2
      %s22 = sadd.s32 %s15, 1
      %s23 = ssub.s32 %s15, %s22
      %p24 = scmp.eq.s32.totalorder %s23, 0
      %s26 = sadd.s32 %s25, 1
      %s27 = scalar_select %p24, %s25, %s26
      %p30 = pneg %p24
      %p31 = scmp.eq.s32.totalorder %s15, 1
      %p32 = por %p30, %p31
      %p33 = scmp.ne.s32.totalorder %s25, %s28
      %p34 = scmp.eq.s32.totalorder %s15, 0
      %p35 = por %p33, %p34
      %p36 = scmp.ne.s32.totalorder %s25, %s28
      %p37 = scmp.eq.s32.totalorder %s20, 1
      %p38 = por %p36, %p37
      %p39 = scmp.ne.s32.totalorder %s28, %s29
      %p40 = scmp.eq.s32.totalorder %s20, 0
      %p41 = por %p39, %p40
      %p42 = scmp.ne.s32.totalorder %s28, %s29
      %p43 = scmp.eq.s32.totalorder %s21, 1
      %p44 = por %p42, %p43
      %p46 = scmp.ne.s32.totalorder %s29, %s45
      %p47 = scmp.eq.s32.totalorder %s21, 0
      %p48 = por %p46, %p47
      %s50 = sadd.s32 %s49, 1
      %p53 = scmp.eq.s32.totalorder %s15, 1
      %p54 = scmp.ne.s32.totalorder %s49, %s51
      %p55 = scmp.eq.s32.totalorder %s15, 0
      %p56 = por %p54, %p55
      %p57 = scmp.ne.s32.totalorder %s49, %s51
      %p58 = scmp.eq.s32.totalorder %s20, 1
      %p59 = por %p57, %p58
      %p60 = scmp.ne.s32.totalorder %s51, %s52
      %p61 = scmp.eq.s32.totalorder %s20, 0
      %p62 = por %p60, %p61
      %p63 = scmp.ne.s32.totalorder %s51, %s52
      %p64 = scmp.eq.s32.totalorder %s21, 1
      %p65 = por %p63, %p64
      %p67 = scmp.ne.s32.totalorder %s52, %s66
      %p68 = scmp.eq.s32.totalorder %s21, 0
      %p69 = por %p67, %p68
      %s71 = sadd.s32 %s70, 1
      %p74 = scmp.eq.s32.totalorder %s15, 1
      %p75 = scmp.ne.s32.totalorder %s70, %s72
      %p76 = scmp.eq.s32.totalorder %s15, 0
      %p77 = por %p75, %p76
      %p78 = scmp.ne.s32.totalorder %s70, %s72
      %p79 = scmp.eq.s32.totalorder %s20, 1
      %p80 = por %p78, %p79
      %p81 = scmp.ne.s32.totalorder %s72, %s73
      %p82 = scmp.eq.s32.totalorder %s20, 0
      %p83 = por %p81, %p82
      %p84 = scmp.ne.s32.totalorder %s72, %s73
      %p85 = scmp.eq.s32.totalorder %s21, 1
      %p86 = por %p84, %p85
      %p88 = scmp.ne.s32.totalorder %s73, %s87
      %p89 = scmp.eq.s32.totalorder %s21, 0
      %p90 = por %p88, %p89
      %s91 = ssub.s32 %s15, %s22
      %p92 = scmp.eq.s32.totalorder %s91, 0
      %s94 = sadd.s32 %s93, 1
      %s95 = scalar_select %p92, %s93, %s94
      %p98 = pneg %p92
      %p99 = scmp.eq.s32.totalorder %s15, 1
      %p100 = por %p98, %p99
      %p101 = scmp.ne.s32.totalorder %s93, %s96
      %p102 = scmp.eq.s32.totalorder %s15, 0
      %p103 = por %p101, %p102
      %p104 = scmp.ne.s32.totalorder %s93, %s96
      %p105 = scmp.eq.s32.totalorder %s20, 1
      %p106 = por %p104, %p105
      %p107 = scmp.ne.s32.totalorder %s96, %s97
      %p108 = scmp.eq.s32.totalorder %s20, 0
      %p109 = por %p107, %p108
      %p110 = scmp.ne.s32.totalorder %s96, %s97
      %p111 = scmp.eq.s32.totalorder %s21, 1
      %p112 = por %p110, %p111
      %p114 = scmp.ne.s32.totalorder %s97, %s113
      %p115 = scmp.eq.s32.totalorder %s21, 0
      %p116 = por %p114, %p115
      %s118 = sadd.s32 %s117, 1
      %p121 = scmp.eq.s32.totalorder %s15, 1
      %p122 = scmp.ne.s32.totalorder %s117, %s119
      %p123 = scmp.eq.s32.totalorder %s15, 0
      %p124 = por %p122, %p123
      %p125 = scmp.ne.s32.totalorder %s117, %s119
      %p126 = scmp.eq.s32.totalorder %s20, 1
      %p127 = por %p125, %p126
      %p128 = scmp.ne.s32.totalorder %s119, %s120
      %p129 = scmp.eq.s32.totalorder %s20, 0
      %p130 = por %p128, %p129
      %p131 = scmp.ne.s32.totalorder %s119, %s120
      %p132 = scmp.eq.s32.totalorder %s21, 1
      %p133 = por %p131, %p132
      %p135 = scmp.ne.s32.totalorder %s120, %s134
      %p136 = scmp.eq.s32.totalorder %s21, 0
      %p137 = por %p135, %p136
      %s139 = sadd.s32 %s138, 1
      %p142 = scmp.eq.s32.totalorder %s15, 1
      %p143 = scmp.ne.s32.totalorder %s138, %s140
      %p144 = scmp.eq.s32.totalorder %s15, 0
      %p145 = por %p143, %p144
      %p146 = scmp.ne.s32.totalorder %s138, %s140
      %p147 = scmp.eq.s32.totalorder %s20, 1
      %p148 = por %p146, %p147
      %p149 = scmp.ne.s32.totalorder %s140, %s141
      %p150 = scmp.eq.s32.totalorder %s20, 0
      %p151 = por %p149, %p150
      %p152 = scmp.ne.s32.totalorder %s140, %s141
      %p153 = scmp.eq.s32.totalorder %s21, 1
      %p154 = por %p152, %p153
      %p156 = scmp.ne.s32.totalorder %s141, %s155
      %p157 = scmp.eq.s32.totalorder %s21, 0
      %p158 = por %p156, %p157
      %s159 = ssub.s32 %s15, %s22
      %p160 = scmp.eq.s32.totalorder %s159, 0
      %s162 = sadd.s32 %s161, 1
      %s163 = scalar_select %p160, %s161, %s162
      %p166 = pneg %p160
      %p167 = scmp.eq.s32.totalorder %s15, 1
      %p168 = por %p166, %p167
      %p169 = scmp.ne.s32.totalorder %s161, %s164
      %p170 = scmp.eq.s32.totalorder %s15, 0
      %p171 = por %p169, %p170
      %p172 = scmp.ne.s32.totalorder %s161, %s164
      %p173 = scmp.eq.s32.totalorder %s20, 1
      %p174 = por %p172, %p173
      %p175 = scmp.ne.s32.totalorder %s164, %s165
      %p176 = scmp.eq.s32.totalorder %s20, 0
      %p177 = por %p175, %p176
      %p178 = scmp.ne.s32.totalorder %s164, %s165
      %p179 = scmp.eq.s32.totalorder %s21, 1
      %p180 = por %p178, %p179
      %p182 = scmp.ne.s32.totalorder %s165, %s181
      %p183 = scmp.eq.s32.totalorder %s21, 0
      %p184 = por %p182, %p183
      %p185 = scmp.le.s32.totalorder 1, %s15
      %p186 = scmp.lt.s32.totalorder %s15, 3
      %p187 = pnand %p185, %p186
      %p188 = pneg %p187
      // Predicated region
      $region9: #{tpu_custom_call.1} parent=5 // pred_check
        _
      $region10: #{tpu_custom_call.1} parent=5 // pred_check_branch
        %190 = sbr.rel (%p187) target = $region12
      $region11: #{tpu_custom_call.1} parent=5 // pred_region
        %s191 = ssub.s32 %s15, 1
        // Predicated region
        $region13: #{tpu_custom_call.1} parent=11 // pred_check
          %p192 = pneg %p62
        $region14: #{tpu_custom_call.1} parent=11 // pred_check_branch
          %194 = sbr.rel (%p192) target = $region16
        $region15: #{tpu_custom_call.1} parent=11 // pred_region
          _
        $region16: #{tpu_custom_call.1} parent=11 // pred_fallthru
          _
        // Predicated region
        $region17: #{tpu_custom_call.1} parent=11 // pred_check
          %p195 = pneg %p83
        $region18: #{tpu_custom_call.1} parent=11 // pred_check_branch
          %197 = sbr.rel (%p195) target = $region20
        $region19: #{tpu_custom_call.1} parent=11 // pred_region
          _
        $region20: #{tpu_custom_call.1} parent=11 // pred_fallthru
          _
        // Predicated region
        $region21: #{tpu_custom_call.1} parent=11 // pred_check
          %p198 = pneg %p130
        $region22: #{tpu_custom_call.1} parent=11 // pred_check_branch
          %200 = sbr.rel (%p198) target = $region24
        $region23: #{tpu_custom_call.1} parent=11 // pred_region
          _
        $region24: #{tpu_custom_call.1} parent=11 // pred_fallthru
          _
        // Predicated region
        $region25: #{tpu_custom_call.1} parent=11 // pred_check
          %p201 = pneg %p151
        $region26: #{tpu_custom_call.1} parent=11 // pred_check_branch
          %203 = sbr.rel (%p201) target = $region28
        $region27: #{tpu_custom_call.1} parent=11 // pred_region
          _
        $region28: #{tpu_custom_call.1} parent=11 // pred_fallthru
          _
      $region12: #{tpu_custom_call.1} parent=5 // pred_fallthru
        _
      %p204 = scmp.lt.s32.totalorder %s15, 2
      // Predicated region
      $region29: #{tpu_custom_call.1} parent=5 // pred_check
        %p205 = pneg %p204
      $region30: #{tpu_custom_call.1} parent=5 // pred_check_branch
        %207 = sbr.rel (%p205) target = $region32
      $region31: #{tpu_custom_call.1} parent=5 // pred_region
        // Predicated region
        $region33: #{tpu_custom_call.1} parent=31 // pred_check
          %p208 = pneg %p35
        $region34: #{tpu_custom_call.1} parent=31 // pred_check_branch
          %210 = sbr.rel (%p208) target = $region36
        $region35: #{tpu_custom_call.1} parent=31 // pred_region
          %p211 = scmp.lt.s32.totalorder %s15, 1
          %s212 = scalar_select %p211, %s15, 1
          %s213 = smul.addr %s212, 8
          %s214 = scalar_lea.vmem %s0, %s213
        $region36: #{tpu_custom_call.1} parent=31 // pred_fallthru
          _
        // Predicated region
        $region37: #{tpu_custom_call.1} parent=31 // pred_check
          %p215 = pneg %p103
        $region38: #{tpu_custom_call.1} parent=31 // pred_check_branch
          %217 = sbr.rel (%p215) target = $region40
        $region39: #{tpu_custom_call.1} parent=31 // pred_region
          %p218 = scmp.lt.s32.totalorder %s15, 1
          %s219 = scalar_select %p218, %s15, 1
          %s220 = smul.addr %s219, 8
          %s221 = scalar_lea.vmem %s3, %s220
        $region40: #{tpu_custom_call.1} parent=31 // pred_fallthru
          _
      $region32: #{tpu_custom_call.1} parent=5 // pred_fallthru
        _
      %p222 = scmp.le.s32.totalorder 1, %s15
      %p223 = scmp.lt.s32.totalorder %s15, 3
      %p224 = pnand %p222, %p223
      %p225 = pneg %p224
      // Predicated region
      $region41: #{tpu_custom_call.1} parent=5 // pred_check
        _
      $region42: #{tpu_custom_call.1} parent=5 // pred_check_branch
        %227 = sbr.rel (%p224) target = $region44
      $region43: #{tpu_custom_call.1} parent=5 // pred_region
        %s228 = ssub.s32 %s15, 1
        %p229 = scmp.lt.s32.totalorder %s20, 1
        %s230 = scalar_select %p229, %s20, 1
        %s231 = smul.addr %s230, 8
        %s232 = scalar_lea.vmem %s0, %s231
        %p233 = pneg %p41
        %p234 = pneg %p38
        %p235 = pneg %p62
        %p236 = pneg %p59
        %p237 = pneg %p83
        %p238 = pneg %p80
        %p239 = scmp.lt.s32.totalorder %s20, 1
        %s240 = scalar_select %p239, %s20, 1
        %s241 = smul.addr %s240, 8
        %s242 = scalar_lea.vmem %s3, %s241
        %p243 = pneg %p109
        %p244 = pneg %p106
        %p245 = pneg %p130
        %p246 = pneg %p127
        %p247 = pneg %p151
        %p248 = pneg %p148
        %p249 = pneg %p177
        %p250 = pneg %p174
        %s251 = sand.u32 %s164, 1
        %s252 = scalar_lea.sflag [#allocation3], %s251
        %s253 = sand.u32 %s164, 1
        %s254 = smul.addr %s253, 8
        %s255 = scalar_lea.vmem [#allocation2], %s254
        %p256 = scmp.lt.s32.totalorder %s20, 1
        %s257 = scalar_select %p256, %s20, 1
        %s258 = smul.addr %s257, 8
        %s259 = scalar_lea.vmem %s0, %s258
        %p260 = scmp.lt.s32.totalorder %s20, 1
        %s261 = scalar_select %p260, %s20, 1
        %s262 = smul.addr %s261, 8
        %s263 = scalar_lea.vmem %s3, %s262
        %v265 = vld [vmem:[%s259] sm:$0xff]
        %v266 = vld [vmem:[%s1] sm:$0xf]
        %v267 = vld [vmem:[%s1 + $0x4] sm:$0xf]
        %v268 = vld [vmem:[%s1 + $0x8] sm:$0xf]
        %v269 = vld [vmem:[%s1 + $0xc] sm:$0xf]
        %v270 = vld [vmem:[%s1 + $0x10] sm:$0xf]
        %v271 = vld [vmem:[%s1 + $0x14] sm:$0xf]
        %v272 = vld [vmem:[%s1 + $0x18] sm:$0xf]
        %v273 = vld [vmem:[%s1 + $0x1c] sm:$0xf]
        %v274 = vld [vmem:[%s1 + $0x20] sm:$0xf]
        %v275 = vld [vmem:[%s1 + $0x24] sm:$0xf]
        %v276 = vld [vmem:[%s1 + $0x28] sm:$0xf]
        %v277 = vld [vmem:[%s1 + $0x2c] sm:$0xf]
        %v278 = vld [vmem:[%s1 + $0x30] sm:$0xf]
        %v279 = vld [vmem:[%s1 + $0x34] sm:$0xf]
        %v280 = vld [vmem:[%s1 + $0x38] sm:$0xf]
        %v281 = vld [vmem:[%s1 + $0x3c] sm:$0xf]
        %v282 = vpack.c.bf16 %v265, %v265
        %v283 = vld [vmem:[%s2] sm:$0x1]
        %v285 = vlaneseq
        %v286 = vshrl.u32 %v285, 7
        %v287 = vsub.s32 0, %v286
        %v288 = vrot.slane %v283, %v287
        %v306 = vunpack.c.l.b16 %v266
        %v307 = vunpack.c.l.b16 %v267
        %v308 = vunpack.c.l.b16 %v268
        %v309 = vunpack.c.l.b16 %v269
        %v310 = vunpack.c.l.b16 %v270
        %v311 = vunpack.c.l.b16 %v271
        %v312 = vunpack.c.l.b16 %v272
        %v313 = vunpack.c.l.b16 %v273
        %v314 = vunpack.c.l.b16 %v274
        %v315 = vunpack.c.l.b16 %v275
        %v316 = vunpack.c.l.b16 %v276
        %v317 = vunpack.c.l.b16 %v277
        %v318 = vunpack.c.l.b16 %v278
        %v319 = vunpack.c.l.b16 %v279
        %v320 = vunpack.c.l.b16 %v280
        %v321 = vunpack.c.l.b16 %v281
        %v322 = vpack.c.b16 %v307, %v306
        %v323 = vpack.c.b16 %v309, %v308
        %v324 = vpack.c.b16 %v311, %v310
        %v325 = vpack.c.b16 %v313, %v312
        %v326 = vpack.c.b16 %v315, %v314
        %v327 = vpack.c.b16 %v317, %v316
        %v328 = vpack.c.b16 %v319, %v318
        %v329 = vpack.c.b16 %v321, %v320
        %338 = vmatprep.subr.bf16.mxu0 0
        %339 = vmatpush1.bf16.msra.mxu0 %v329
        %340 = vmatprep.subr.bf16.mxu0 0
        %341 = vmatpush1.bf16.msra.mxu0 %v328
        %342 = vmatprep.subr.bf16.mxu0 0
        %343 = vmatpush1.bf16.msra.mxu0 %v327
        %344 = vmatprep.subr.bf16.mxu0 0
        %345 = vmatpush1.bf16.msra.mxu0 %v326
        %346 = vmatprep.subr.bf16.mxu0 0
        %347 = vmatpush1.bf16.msra.mxu0 %v325
        %348 = vmatprep.subr.bf16.mxu0 0
        %349 = vmatpush1.bf16.msra.mxu0 %v324
        %350 = vmatprep.subr.bf16.mxu0 0
        %351 = vmatpush1.bf16.msra.mxu0 %v323
        %352 = vmatprep.subr.bf16.mxu0 0
        %353 = vmatpush1.bf16.msra.mxu0 %v322
        %354 = vmatprep.subr.bf16.mxu0 0
        %355 = vmatpush2.bf16.msra.mxu0 0
        %356 = vmatprep.subr.bf16.mxu0 0
        %357 = vmatpush2.bf16.msra.mxu0 0
        %358 = vmatprep.subr.bf16.mxu0 0
        %359 = vmatpush2.bf16.msra.mxu0 0
        %360 = vmatprep.subr.bf16.mxu0 0
        %361 = vmatpush2.bf16.msra.mxu0 0
        %362 = vmatprep.subr.bf16.mxu0 0
        %363 = vmatpush2.bf16.msra.mxu0 0
        %364 = vmatprep.subr.bf16.mxu0 0
        %365 = vmatpush2.bf16.msra.mxu0 0
        %366 = vmatprep.subr.bf16.mxu0 0
        %367 = vmatpush2.bf16.msra.mxu0 0
        %368 = vmatprep.subr.bf16.mxu0 0
        %369 = vmatpush2.bf16.msra.mxu0 0
        %370 = vmatprep.mubr.bf16.mxu0 0
        %371 = vmatmul.mubr.bf16.gmra.mxu0 %v282
        %v372 = vpop.f32.mrf.mxu0
        %v373 = vadd.f32 %v288, %v372
        %v374 = vpop.f32.mrf.mxu0
        %v375 = vpop.f32.mrf.mxu0
        %v376 = vpop.f32.mrf.mxu0
        %377 = vdwg.mxu0
        %v378 = vld [vmem:[%s263] sm:$0xff]
        %v379 = vadd.f32 %v373, %v378
        %vm380 = vcmask 261120
        %v381 = vsel %vm380, %v379, 0.0
        %382 = vadd.xlane.f32.xlu0 %v381
        %v383 = vpop.xlane.xlu0 %382
        %v384 = vrcp.pop 32.0
        %v385 = vmul.f32 %v383, %v384
        %v386 = vsub.f32 %v379, %v385
        %v387 = vmul.f32 %v386, %v386
        %v388 = vsel %vm380, %v387, 0.0
        %389 = vadd.xlane.f32.xlu0 %v388
        %v390 = vpop.xlane.xlu0 %389
        %v391 = vmul.f32 %v390, %v384
        %v392 = vadd.f32 %v391, 1e-12
        %v393 = vrsqrt.pop %v392
        %v394 = vmul.f32 %v386, %v393
        %v395 = vld [vmem:[%s4] sm:$0x1]
        %v397 = vlaneseq
        %v398 = vshrl.u32 %v397, 7
        %v399 = vsub.s32 0, %v398
        %v400 = vrot.slane %v395, %v399
        %v402 = vmul.f32 %v400, %v394
        %v403 = vld [vmem:[%s5] sm:$0x1]
        %v405 = vlaneseq
        %v406 = vshrl.u32 %v405, 7
        %v407 = vsub.s32 0, %v406
        %v408 = vrot.slane %v403, %v407
        %v410 = vadd.f32 %v402, %v408
        %411 = vst.msk [vmem:[%s255] sm:$0xff] %vm380, %v410
        %s412 = sand.u32 %s164, 1
        %s413 = scalar_lea.sflag [#allocation3], %s412
        %s414 = sand.u32 %s164, 1
        %s415 = smul.addr %s414, 8
        %s416 = scalar_lea.vmem [#allocation2], %s415
        // Predicated region
        $region45: #{tpu_custom_call.1} parent=43 // pred_check
          %p417 = pneg %p174
        $region46: #{tpu_custom_call.1} parent=43 // pred_check_branch
          %419 = sbr.rel (%p417) target = $region48
        $region47: #{tpu_custom_call.1} parent=43 // pred_region
          %s421 = ssub.s32 128, 128
          %422 = vsyncadd %s413, %s421
          %s423 = smul.addr %s20, 128
          %s424 = scalar_lea.hbm %s6, %s423
          %s426 = sshll.u32 %s416, 4
          %s427 = int_to_ptr.vmem [resolvable:$true] %s426
          %429 = dma.vmem_to_hbm [thread:$0]  %s427, 128, %s424, %s413
        $region48: #{tpu_custom_call.1} parent=43 // pred_fallthru
          _
      $region44: #{tpu_custom_call.1} parent=5 // pred_fallthru
        _
      %p430 = scmp.le.s32.totalorder 2, %s15
      // Predicated region
      $region49: #{tpu_custom_call.1} parent=5 // pred_check
        %p431 = pneg %p430
      $region50: #{tpu_custom_call.1} parent=5 // pred_check_branch
        %433 = sbr.rel (%p431) target = $region52
      $region51: #{tpu_custom_call.1} parent=5 // pred_region
        %s434 = ssub.s32 %s15, 2
        // Predicated region
        $region53: #{tpu_custom_call.1} parent=51 // pred_check
          %p435 = pneg %p180
        $region54: #{tpu_custom_call.1} parent=51 // pred_check_branch
          %437 = sbr.rel (%p435) target = $region56
        $region55: #{tpu_custom_call.1} parent=51 // pred_region
          %s438 = sand.u32 %s165, 1
          %s439 = scalar_lea.sflag [#allocation3], %s438
          %s440 = sand.u32 %s165, 1
          %s441 = smul.addr %s440, 8
          %s442 = scalar_lea.vmem [#allocation2], %s441
          %443 = dma.done %s439, 128
        $region56: #{tpu_custom_call.1} parent=51 // pred_fallthru
          _
      $region52: #{tpu_custom_call.1} parent=5 // pred_fallthru
        _
    $region6: #{tpu_custom_call.1} parent=1 // loop_footer
      %s19 = sadd.s32 1, %s15
    $region7: #{tpu_custom_call.1} parent=1 // loop_footer_branch
      %14 = sbr.rel target = $region3
    $region8: #{tpu_custom_call.1} parent=1 // loop_exit
      _
    %444 = vsyncpa [#allocation3], 1
    %s445 = scalar_lea.sflag [#allocation3], 1
    %446 = vsyncpa %s445, 1

</llo_original>
